<compile_context>
chip_gen: v5e
topology: v5e:2x2
jax: 0.10.0
libtpu: 0.0.40
codegen_flags: <defaults>
</compile_context>

<pallas_src>
import jax
import jax.numpy as jnp
from jax import lax
from jax.experimental import pallas as pl
from jax.experimental.pallas import tpu as pltpu


def sentiment_rnn_kernel(x_ref, wih_ref, whh_ref, bias_ref, wfc_ref, bfc_ref,
                         out_ref, h_ref, m_ref, pre_ref):
    # x_ref:    (Tc, Bb, E)  bf16 time-major embedded chunk
    # wih_ref:  (E, H) bf16, whh_ref: (H, H) bf16, wfc_ref: (H, O) bf16
    # bias_ref: (1, H) f32 (= bih + bhh), bfc_ref: (1, O) f32
    # out_ref:  (Bb, O) f32 logits block
    # h_ref/m_ref: (Bb, H) f32 carried state, pre_ref: (Tc, Bb, H) f32 scratch
    t_idx = pl.program_id(1)
    Tc, Bb, E = x_ref.shape
    H = whh_ref.shape[0]

    # ---- init carried state at the first time chunk of this batch block ----
    @pl.when(t_idx == 0)
    def _():
        h_ref[...] = jnp.zeros_like(h_ref)
        # tanh output lies in [-1, 1], so -1.0 is a safe (NaN-free) max floor.
        m_ref[...] = jnp.full_like(m_ref, -1.0)

    # ---- hoisted input projection: ONE big MXU matmul for the whole chunk ----
    x_flat = x_ref[...].reshape(Tc * Bb, E)                       # bf16
    pre = jnp.dot(x_flat, wih_ref[...],
                  preferred_element_type=jnp.float32)             # f32 accum
    pre_ref[...] = (pre + bias_ref[...]).reshape(Tc, Bb, H)

    whh = whh_ref[...]                                            # bf16, resident

    # ---- serial recurrence over the chunk (unrolled for scheduler visibility) ----
    def step(t, carry):
        h, m = carry
        pre_t = pre_ref[t]                                        # (Bb, H) f32
        h_new = jnp.tanh(pre_t + jnp.dot(h.astype(jnp.bfloat16), whh,
                                         preferred_element_type=jnp.float32))
        return h_new, jnp.maximum(m, h_new)

    h, m = lax.fori_loop(0, Tc, step, (h_ref[...], m_ref[...]), unroll=True)
    h_ref[...] = h
    m_ref[...] = m

    # ---- final classifier on the last time chunk: fc(max_pool(output)) ----
    @pl.when(t_idx == pl.num_programs(1) - 1)
    def _():
        out_ref[...] = (jnp.dot(m.astype(jnp.bfloat16), wfc_ref[...],
                                preferred_element_type=jnp.float32)
                        + bfc_ref[...]).astype(out_ref.dtype)


def sentiment_rnn_forward(text, embedding_matrix, w_ih, w_hh, b_ih, b_hh,
                          w_fc, b_fc, *, block_b=8, block_t=8):
    """text: (B, T) int32 token ids. Returns logits (B, O)."""
    B, T = text.shape
    E = embedding_matrix.shape[1]
    H = w_hh.shape[0]
    O = w_fc.shape[0]

    bb = min(block_b, B)
    tc = min(block_t, T)
    assert B % bb == 0 and T % tc == 0, "demo config must tile evenly"

    # Embedding gather directly in TIME-MAJOR layout (transpose the small int-id
    # matrix, not the big activation tensor), cast once to bf16 for the MXU.
    x_tm = jnp.take(embedding_matrix, text.T, axis=0).astype(jnp.bfloat16)  # (T, B, E)

    # Pre-transpose weights so the kernel does plain row-major matmuls; fold the
    # two RNN biases into one.
    wih_t = w_ih.T.astype(jnp.bfloat16)                    # (E, H)
    whh_t = w_hh.T.astype(jnp.bfloat16)                    # (H, H)
    wfc_t = w_fc.T.astype(jnp.bfloat16)                    # (H, O)
    bias = (b_ih + b_hh).reshape(1, H).astype(jnp.float32)  # (1, H)
    bfc = b_fc.reshape(1, O).astype(jnp.float32)            # (1, O)

    grid = (B // bb, T // tc)

    return pl.pallas_call(
        sentiment_rnn_kernel,
        out_shape=jax.ShapeDtypeStruct((B, O), jnp.float32),
        grid_spec=pltpu.PrefetchScalarGridSpec(
            num_scalar_prefetch=0,
            grid=grid,
            in_specs=[
                pl.BlockSpec((tc, bb, E), lambda b, t: (t, b, 0)),  # x chunk
                pl.BlockSpec((E, H), lambda b, t: (0, 0)),          # Wih
                pl.BlockSpec((H, H), lambda b, t: (0, 0)),          # Whh
                pl.BlockSpec((1, H), lambda b, t: (0, 0)),          # bih+bhh
                pl.BlockSpec((H, O), lambda b, t: (0, 0)),          # Wfc
                pl.BlockSpec((1, O), lambda b, t: (0, 0)),          # bfc
            ],
            out_specs=pl.BlockSpec((bb, O), lambda b, t: (b, 0)),
            scratch_shapes=[
                pltpu.VMEM((bb, H), jnp.float32),      # h carry
                pltpu.VMEM((bb, H), jnp.float32),      # running max
                pltpu.VMEM((tc, bb, H), jnp.float32),  # hoisted x @ Wih projection
            ],
        ),
        compiler_params=pltpu.CompilerParams(
            dimension_semantics=("parallel", "arbitrary"),
        ),
    )(x_tm, wih_t, whh_t, bias, wfc_t, bfc)


if __name__ == "__main__":
    # Small, hardware-aligned demo configuration (H, E multiples of 128 lanes;
    # B, Tc multiples of 8 sublanes) consistent with the module's __init__.
    vocab_size = 50
    embedding_dim = 128
    hidden_dim = 128
    output_dim = 2
    batch = 16       # -> 2 batch blocks of 8 (parallel axis)
    seq_len = 16     # -> 2 time chunks of 8 (arbitrary axis)

    key = jax.random.PRNGKey(0)
    k_emb, k_wih, k_whh, k_bih, k_bhh, k_wfc, k_bfc, k_txt = jax.random.split(key, 8)

    embedding_matrix = jax.random.normal(k_emb, (vocab_size, embedding_dim), jnp.float32) * 0.1
    # nn.RNN parameters: weight_ih_l0 (H, E), weight_hh_l0 (H, H), biases (H,)
    w_ih = jax.random.normal(k_wih, (hidden_dim, embedding_dim), jnp.float32) * 0.1
    w_hh = jax.random.normal(k_whh, (hidden_dim, hidden_dim), jnp.float32) * 0.1
    b_ih = jax.random.normal(k_bih, (hidden_dim,), jnp.float32) * 0.1
    b_hh = jax.random.normal(k_bhh, (hidden_dim,), jnp.float32) * 0.1
    # nn.Linear: weight (O, H), bias (O,)
    w_fc = jax.random.normal(k_wfc, (output_dim, hidden_dim), jnp.float32) * 0.1
    b_fc = jax.random.normal(k_bfc, (output_dim,), jnp.float32) * 0.1

    text = jax.random.randint(k_txt, (batch, seq_len), 0, vocab_size, dtype=jnp.int32)

    logits = sentiment_rnn_forward(text, embedding_matrix,
                                   w_ih, w_hh, b_ih, b_hh, w_fc, b_fc)
    jax.block_until_ready(logits)

    # Pure-JAX reference with the SAME bf16 matmul inputs / f32 accumulation.
    x_tm = jnp.take(embedding_matrix, text.T, axis=0).astype(jnp.bfloat16)  # (T, B, E)
    wih_bf = w_ih.T.astype(jnp.bfloat16)
    whh_bf = w_hh.T.astype(jnp.bfloat16)
    wfc_bf = w_fc.T.astype(jnp.bfloat16)
    bias32 = (b_ih + b_hh).reshape(1, hidden_dim).astype(jnp.float32)

    def ref_step(h, x_t):
        pre = jnp.dot(x_t, wih_bf, preferred_element_type=jnp.float32) + bias32
        h_new = jnp.tanh(pre + jnp.dot(h.astype(jnp.bfloat16), whh_bf,
                                       preferred_element_type=jnp.float32))
        return h_new, h_new

    h0 = jnp.zeros((batch, hidden_dim), jnp.float32)
    _, outs = lax.scan(ref_step, h0, x_tm)
    m_pool = jnp.max(outs, axis=0)
    ref = (jnp.dot(m_pool.astype(jnp.bfloat16), wfc_bf,
                   preferred_element_type=jnp.float32)
           + b_fc.reshape(1, output_dim))

    assert jnp.allclose(logits, ref, atol=1e-3, rtol=1e-3), (logits, ref)

    print("KERNEL_OK")
</pallas_src>

<mosaic_0001>
module attributes {stable_mosaic.version = 11 : i64} {
  func.func @sentiment_rnn_kernel(%arg0: i32, %arg1: i32, %arg2: memref<8x8x128xbf16, #tpu.memory_space<vmem>>, %arg3: memref<128x128xbf16, #tpu.memory_space<vmem>>, %arg4: memref<128x128xbf16, #tpu.memory_space<vmem>>, %arg5: memref<1x128xf32, #tpu.memory_space<vmem>>, %arg6: memref<128x2xbf16, #tpu.memory_space<vmem>>, %arg7: memref<1x2xf32, #tpu.memory_space<vmem>>, %arg8: memref<8x2xf32, #tpu.memory_space<vmem>>, %arg9: memref<8x128xf32, #tpu.memory_space<vmem>>, %arg10: memref<8x128xf32, #tpu.memory_space<vmem>>, %arg11: memref<8x8x128xf32, #tpu.memory_space<vmem>>) attributes {dimension_semantics = [#tpu.dimension_semantics<parallel>, #tpu.dimension_semantics<arbitrary>], iteration_bounds = array<i64: 2, 2>, scalar_prefetch = 0 : i64, scratch_operands = 3 : i64, tpu.core_type = #tpu.core_type<tc>, window_params = [{transform_indices = @transform_0, window_bounds = array<i64: 8, 8, 128>}, {pipeline_mode = #tpu.pipeline_mode<synchronous>, transform_indices = @transform_1, window_bounds = array<i64: 128, 128>}, {pipeline_mode = #tpu.pipeline_mode<synchronous>, transform_indices = @transform_2, window_bounds = array<i64: 128, 128>}, {pipeline_mode = #tpu.pipeline_mode<synchronous>, transform_indices = @transform_3, window_bounds = array<i64: 1, 128>}, {pipeline_mode = #tpu.pipeline_mode<synchronous>, transform_indices = @transform_4, window_bounds = array<i64: 128, 2>}, {pipeline_mode = #tpu.pipeline_mode<synchronous>, transform_indices = @transform_5, window_bounds = array<i64: 1, 2>}, {transform_indices = @transform_6, window_bounds = array<i64: 8, 2>}]} {
    %c0_i32 = arith.constant 0 : i32
    %0 = arith.cmpi eq, %arg1, %c0_i32 : i32
    %1 = arith.extui %0 : i1 to i32
    %c0_i32_0 = arith.constant 0 : i32
    %2 = arith.cmpi ne, %1, %c0_i32_0 : i32
    scf.if %2 {
      %cst_47 = arith.constant 0.000000e+00 : f32
      %84 = vector.broadcast %cst_47 : f32 to vector<8x128xf32>
      %c0_48 = arith.constant 0 : index
      %c0_49 = arith.constant 0 : index
      %85 = vector.load %arg9[%c0_48, %c0_49] : memref<8x128xf32, #tpu.memory_space<vmem>>, vector<8x128xf32>
      tpu.vector_store %arg9[%c0_48, %c0_49], %84 {strides = array<i32>} : memref<8x128xf32, #tpu.memory_space<vmem>>, vector<8x128xf32>,
      %cst_50 = arith.constant -1.000000e+00 : f32
      %86 = vector.broadcast %cst_50 : f32 to vector<8x128xf32>
      %c0_51 = arith.constant 0 : index
      %c0_52 = arith.constant 0 : index
      %87 = vector.load %arg10[%c0_51, %c0_52] : memref<8x128xf32, #tpu.memory_space<vmem>>, vector<8x128xf32>
      tpu.vector_store %arg10[%c0_51, %c0_52], %86 {strides = array<i32>} : memref<8x128xf32, #tpu.memory_space<vmem>>, vector<8x128xf32>,
    } else {
    }
    %c0 = arith.constant 0 : index
    %c0_1 = arith.constant 0 : index
    %c0_2 = arith.constant 0 : index
    %3 = vector.load %arg2[%c0, %c0_1, %c0_2] : memref<8x8x128xbf16, #tpu.memory_space<vmem>>, vector<8x8x128xbf16>
    %4 = vector.shape_cast %3 : vector<8x8x128xbf16> to vector<64x128xbf16>
    %c0_3 = arith.constant 0 : index
    %c0_4 = arith.constant 0 : index
    %5 = vector.load %arg3[%c0_3, %c0_4] : memref<128x128xbf16, #tpu.memory_space<vmem>>, vector<128x128xbf16>
    %cst = arith.constant dense<0.000000e+00> : vector<64x128xf32>
    %6 = tpu.matmul %4, %5, %cst {dimension_numbers = #tpu.dot_dimension_numbers<[1], [0], [0], [1], [0, 0, 1, 1], [], []>} : vector<64x128xbf16>, vector<128x128xbf16>, vector<64x128xf32> -> vector<64x128xf32>
    %c0_5 = arith.constant 0 : index
    %c0_6 = arith.constant 0 : index
    %7 = vector.load %arg5[%c0_5, %c0_6] : memref<1x128xf32, #tpu.memory_space<vmem>>, vector<1x128xf32>
    %8 = vector.broadcast %7 : vector<1x128xf32> to vector<64x128xf32>
    %9 = arith.addf %6, %8 : vector<64x128xf32>
    %10 = vector.shape_cast %9 : vector<64x128xf32> to vector<8x8x128xf32>
    %c0_7 = arith.constant 0 : index
    %c0_8 = arith.constant 0 : index
    %c0_9 = arith.constant 0 : index
    %11 = vector.load %arg11[%c0_7, %c0_8, %c0_9] : memref<8x8x128xf32, #tpu.memory_space<vmem>>, vector<8x8x128xf32>
    tpu.vector_store %arg11[%c0_7, %c0_8, %c0_9], %10 {strides = array<i32>} : memref<8x8x128xf32, #tpu.memory_space<vmem>>, vector<8x8x128xf32>,
    %c0_10 = arith.constant 0 : index
    %c0_11 = arith.constant 0 : index
    %12 = vector.load %arg4[%c0_10, %c0_11] : memref<128x128xbf16, #tpu.memory_space<vmem>>, vector<128x128xbf16>
    %c0_12 = arith.constant 0 : index
    %c0_13 = arith.constant 0 : index
    %13 = vector.load %arg9[%c0_12, %c0_13] : memref<8x128xf32, #tpu.memory_space<vmem>>, vector<8x128xf32>
    %c0_14 = arith.constant 0 : index
    %c0_15 = arith.constant 0 : index
    %14 = vector.load %arg10[%c0_14, %c0_15] : memref<8x128xf32, #tpu.memory_space<vmem>>, vector<8x128xf32>
    %c0_i32_16 = arith.constant 0 : i32
    %15 = arith.index_cast %c0_i32_16 : i32 to index
    %c0_17 = arith.constant 0 : index
    %c0_18 = arith.constant 0 : index
    %16 = vector.load %arg11[%15, %c0_17, %c0_18] : memref<8x8x128xf32, #tpu.memory_space<vmem>>, vector<1x8x128xf32>
    %17 = vector.shape_cast %16 : vector<1x8x128xf32> to vector<8x128xf32>
    %18 = arith.truncf %13 : vector<8x128xf32> to vector<8x128xbf16>
    %cst_19 = arith.constant dense<0.000000e+00> : vector<8x128xf32>
    %19 = tpu.matmul %18, %12, %cst_19 {dimension_numbers = #tpu.dot_dimension_numbers<[1], [0], [0], [1], [0, 0, 1, 1], [], []>} : vector<8x128xbf16>, vector<128x128xbf16>, vector<8x128xf32> -> vector<8x128xf32>
    %20 = arith.addf %17, %19 : vector<8x128xf32>
    %21 = math.tanh %20 : vector<8x128xf32>
    %22 = arith.maximumf %14, %21 : vector<8x128xf32>
    %c1_i32 = arith.constant 1 : i32
    %23 = arith.index_cast %c1_i32 : i32 to index
    %c0_20 = arith.constant 0 : index
    %c0_21 = arith.constant 0 : index
    %24 = vector.load %arg11[%23, %c0_20, %c0_21] : memref<8x8x128xf32, #tpu.memory_space<vmem>>, vector<1x8x128xf32>
    %25 = vector.shape_cast %24 : vector<1x8x128xf32> to vector<8x128xf32>
    %26 = arith.truncf %21 : vector<8x128xf32> to vector<8x128xbf16>
    %cst_22 = arith.constant dense<0.000000e+00> : vector<8x128xf32>
    %27 = tpu.matmul %26, %12, %cst_22 {dimension_numbers = #tpu.dot_dimension_numbers<[1], [0], [0], [1], [0, 0, 1, 1], [], []>} : vector<8x128xbf16>, vector<128x128xbf16>, vector<8x128xf32> -> vector<8x128xf32>
    %28 = arith.addf %25, %27 : vector<8x128xf32>
    %29 = math.tanh %28 : vector<8x128xf32>
    %30 = arith.maximumf %22, %29 : vector<8x128xf32>
    %c2_i32 = arith.constant 2 : i32
    %31 = arith.index_cast %c2_i32 : i32 to index
    %c0_23 = arith.constant 0 : index
    %c0_24 = arith.constant 0 : index
    %32 = vector.load %arg11[%31, %c0_23, %c0_24] : memref<8x8x128xf32, #tpu.memory_space<vmem>>, vector<1x8x128xf32>
    %33 = vector.shape_cast %32 : vector<1x8x128xf32> to vector<8x128xf32>
    %34 = arith.truncf %29 : vector<8x128xf32> to vector<8x128xbf16>
    %cst_25 = arith.constant dense<0.000000e+00> : vector<8x128xf32>
    %35 = tpu.matmul %34, %12, %cst_25 {dimension_numbers = #tpu.dot_dimension_numbers<[1], [0], [0], [1], [0, 0, 1, 1], [], []>} : vector<8x128xbf16>, vector<128x128xbf16>, vector<8x128xf32> -> vector<8x128xf32>
    %36 = arith.addf %33, %35 : vector<8x128xf32>
    %37 = math.tanh %36 : vector<8x128xf32>
    %38 = arith.maximumf %30, %37 : vector<8x128xf32>
    %c3_i32 = arith.constant 3 : i32
    %39 = arith.index_cast %c3_i32 : i32 to index
    %c0_26 = arith.constant 0 : index
    %c0_27 = arith.constant 0 : index
    %40 = vector.load %arg11[%39, %c0_26, %c0_27] : memref<8x8x128xf32, #tpu.memory_space<vmem>>, vector<1x8x128xf32>
    %41 = vector.shape_cast %40 : vector<1x8x128xf32> to vector<8x128xf32>
    %42 = arith.truncf %37 : vector<8x128xf32> to vector<8x128xbf16>
    %cst_28 = arith.constant dense<0.000000e+00> : vector<8x128xf32>
    %43 = tpu.matmul %42, %12, %cst_28 {dimension_numbers = #tpu.dot_dimension_numbers<[1], [0], [0], [1], [0, 0, 1, 1], [], []>} : vector<8x128xbf16>, vector<128x128xbf16>, vector<8x128xf32> -> vector<8x128xf32>
    %44 = arith.addf %41, %43 : vector<8x128xf32>
    %45 = math.tanh %44 : vector<8x128xf32>
    %46 = arith.maximumf %38, %45 : vector<8x128xf32>
    %c4_i32 = arith.constant 4 : i32
    %47 = arith.index_cast %c4_i32 : i32 to index
    %c0_29 = arith.constant 0 : index
    %c0_30 = arith.constant 0 : index
    %48 = vector.load %arg11[%47, %c0_29, %c0_30] : memref<8x8x128xf32, #tpu.memory_space<vmem>>, vector<1x8x128xf32>
    %49 = vector.shape_cast %48 : vector<1x8x128xf32> to vector<8x128xf32>
    %50 = arith.truncf %45 : vector<8x128xf32> to vector<8x128xbf16>
    %cst_31 = arith.constant dense<0.000000e+00> : vector<8x128xf32>
    %51 = tpu.matmul %50, %12, %cst_31 {dimension_numbers = #tpu.dot_dimension_numbers<[1], [0], [0], [1], [0, 0, 1, 1], [], []>} : vector<8x128xbf16>, vector<128x128xbf16>, vector<8x128xf32> -> vector<8x128xf32>
    %52 = arith.addf %49, %51 : vector<8x128xf32>
    %53 = math.tanh %52 : vector<8x128xf32>
    %54 = arith.maximumf %46, %53 : vector<8x128xf32>
    %c5_i32 = arith.constant 5 : i32
    %55 = arith.index_cast %c5_i32 : i32 to index
    %c0_32 = arith.constant 0 : index
    %c0_33 = arith.constant 0 : index
    %56 = vector.load %arg11[%55, %c0_32, %c0_33] : memref<8x8x128xf32, #tpu.memory_space<vmem>>, vector<1x8x128xf32>
    %57 = vector.shape_cast %56 : vector<1x8x128xf32> to vector<8x128xf32>
    %58 = arith.truncf %53 : vector<8x128xf32> to vector<8x128xbf16>
    %cst_34 = arith.constant dense<0.000000e+00> : vector<8x128xf32>
    %59 = tpu.matmul %58, %12, %cst_34 {dimension_numbers = #tpu.dot_dimension_numbers<[1], [0], [0], [1], [0, 0, 1, 1], [], []>} : vector<8x128xbf16>, vector<128x128xbf16>, vector<8x128xf32> -> vector<8x128xf32>
    %60 = arith.addf %57, %59 : vector<8x128xf32>
    %61 = math.tanh %60 : vector<8x128xf32>
    %62 = arith.maximumf %54, %61 : vector<8x128xf32>
    %c6_i32 = arith.constant 6 : i32
    %63 = arith.index_cast %c6_i32 : i32 to index
    %c0_35 = arith.constant 0 : index
    %c0_36 = arith.constant 0 : index
    %64 = vector.load %arg11[%63, %c0_35, %c0_36] : memref<8x8x128xf32, #tpu.memory_space<vmem>>, vector<1x8x128xf32>
    %65 = vector.shape_cast %64 : vector<1x8x128xf32> to vector<8x128xf32>
    %66 = arith.truncf %61 : vector<8x128xf32> to vector<8x128xbf16>
    %cst_37 = arith.constant dense<0.000000e+00> : vector<8x128xf32>
    %67 = tpu.matmul %66, %12, %cst_37 {dimension_numbers = #tpu.dot_dimension_numbers<[1], [0], [0], [1], [0, 0, 1, 1], [], []>} : vector<8x128xbf16>, vector<128x128xbf16>, vector<8x128xf32> -> vector<8x128xf32>
    %68 = arith.addf %65, %67 : vector<8x128xf32>
    %69 = math.tanh %68 : vector<8x128xf32>
    %70 = arith.maximumf %62, %69 : vector<8x128xf32>
    %c7_i32 = arith.constant 7 : i32
    %71 = arith.index_cast %c7_i32 : i32 to index
    %c0_38 = arith.constant 0 : index
    %c0_39 = arith.constant 0 : index
    %72 = vector.load %arg11[%71, %c0_38, %c0_39] : memref<8x8x128xf32, #tpu.memory_space<vmem>>, vector<1x8x128xf32>
    %73 = vector.shape_cast %72 : vector<1x8x128xf32> to vector<8x128xf32>
    %74 = arith.truncf %69 : vector<8x128xf32> to vector<8x128xbf16>
    %cst_40 = arith.constant dense<0.000000e+00> : vector<8x128xf32>
    %75 = tpu.matmul %74, %12, %cst_40 {dimension_numbers = #tpu.dot_dimension_numbers<[1], [0], [0], [1], [0, 0, 1, 1], [], []>} : vector<8x128xbf16>, vector<128x128xbf16>, vector<8x128xf32> -> vector<8x128xf32>
    %76 = arith.addf %73, %75 : vector<8x128xf32>
    %77 = math.tanh %76 : vector<8x128xf32>
    %78 = arith.maximumf %70, %77 : vector<8x128xf32>
    %c8_i32 = arith.constant 8 : i32
    %c0_41 = arith.constant 0 : index
    %c0_42 = arith.constant 0 : index
    %79 = vector.load %arg9[%c0_41, %c0_42] : memref<8x128xf32, #tpu.memory_space<vmem>>, vector<8x128xf32>
    tpu.vector_store %arg9[%c0_41, %c0_42], %77 {strides = array<i32>} : memref<8x128xf32, #tpu.memory_space<vmem>>, vector<8x128xf32>,
    %c0_43 = arith.constant 0 : index
    %c0_44 = arith.constant 0 : index
    %80 = vector.load %arg10[%c0_43, %c0_44] : memref<8x128xf32, #tpu.memory_space<vmem>>, vector<8x128xf32>
    tpu.vector_store %arg10[%c0_43, %c0_44], %78 {strides = array<i32>} : memref<8x128xf32, #tpu.memory_space<vmem>>, vector<8x128xf32>,
    %c1_i32_45 = arith.constant 1 : i32
    %81 = arith.cmpi eq, %arg1, %c1_i32_45 : i32
    %82 = arith.extui %81 : i1 to i32
    %c0_i32_46 = arith.constant 0 : i32
    %83 = arith.cmpi ne, %82, %c0_i32_46 : i32
    scf.if %83 {
      %84 = arith.truncf %78 : vector<8x128xf32> to vector<8x128xbf16>
      %c0_47 = arith.constant 0 : index
      %c0_48 = arith.constant 0 : index
      %85 = vector.load %arg6[%c0_47, %c0_48] : memref<128x2xbf16, #tpu.memory_space<vmem>>, vector<128x2xbf16>
      %cst_49 = arith.constant dense<0.000000e+00> : vector<8x2xf32>
      %86 = tpu.matmul %84, %85, %cst_49 {dimension_numbers = #tpu.dot_dimension_numbers<[1], [0], [0], [1], [0, 0, 1, 1], [], []>} : vector<8x128xbf16>, vector<128x2xbf16>, vector<8x2xf32> -> vector<8x2xf32>
      %c0_50 = arith.constant 0 : index
      %c0_51 = arith.constant 0 : index
      %87 = vector.load %arg7[%c0_50, %c0_51] : memref<1x2xf32, #tpu.memory_space<vmem>>, vector<1x2xf32>
      %88 = vector.broadcast %87 : vector<1x2xf32> to vector<8x2xf32>
      %89 = arith.addf %86, %88 : vector<8x2xf32>
      %c0_52 = arith.constant 0 : index
      %c0_53 = arith.constant 0 : index
      %90 = vector.load %arg8[%c0_52, %c0_53] : memref<8x2xf32, #tpu.memory_space<vmem>>, vector<8x2xf32>
      tpu.vector_store %arg8[%c0_52, %c0_53], %89 {strides = array<i32>} : memref<8x2xf32, #tpu.memory_space<vmem>>, vector<8x2xf32>,
    } else {
    }
    return
  }
  func.func @transform_0(%arg0: i32, %arg1: i32) -> (i32, i32, i32) {
    %c0_i32 = arith.constant 0 : i32
    %c0_i32_0 = arith.constant 0 : i32
    return %arg1, %arg0, %c0_i32 : i32, i32, i32
  }
  func.func @transform_1(%arg0: i32, %arg1: i32) -> (i32, i32) {
    %c0_i32 = arith.constant 0 : i32
    %c0_i32_0 = arith.constant 0 : i32
    %c0_i32_1 = arith.constant 0 : i32
    return %c0_i32, %c0_i32_0 : i32, i32
  }
  func.func @transform_2(%arg0: i32, %arg1: i32) -> (i32, i32) {
    %c0_i32 = arith.constant 0 : i32
    %c0_i32_0 = arith.constant 0 : i32
    %c0_i32_1 = arith.constant 0 : i32
    return %c0_i32, %c0_i32_0 : i32, i32
  }
  func.func @transform_3(%arg0: i32, %arg1: i32) -> (i32, i32) {
    %c0_i32 = arith.constant 0 : i32
    %c0_i32_0 = arith.constant 0 : i32
    %c0_i32_1 = arith.constant 0 : i32
    return %c0_i32, %c0_i32_0 : i32, i32
  }
  func.func @transform_4(%arg0: i32, %arg1: i32) -> (i32, i32) {
    %c0_i32 = arith.constant 0 : i32
    %c0_i32_0 = arith.constant 0 : i32
    %c0_i32_1 = arith.constant 0 : i32
    return %c0_i32, %c0_i32_0 : i32, i32
  }
  func.func @transform_5(%arg0: i32, %arg1: i32) -> (i32, i32) {
    %c0_i32 = arith.constant 0 : i32
    %c0_i32_0 = arith.constant 0 : i32
    %c0_i32_1 = arith.constant 0 : i32
    return %c0_i32, %c0_i32_0 : i32, i32
  }
  func.func @transform_6(%arg0: i32, %arg1: i32) -> (i32, i32) {
    %c0_i32 = arith.constant 0 : i32
    %c0_i32_0 = arith.constant 0 : i32
    return %arg0, %c0_i32 : i32, i32
  }
}

</mosaic_0001>

<llo_original>
// kernel: tpu_custom_call.1
$region0: #{tpu_custom_call.1}
  #allocation0 [shape = 'u32[]', space=smem, size = 0x4, offset = 0x4, fixed_abs, tag = 'smem constant byte address 0x4 - core index']
  #allocation1 [shape = 'u32[72,128]{1,0:T(1,128)}', space=vmem, size = 0x9000, scoped, tag = 'internal scratch']
  #allocation2 [shape = 'f32[8,128]{1,0:T(8,128)}', space=vmem, size = 0x1000, scoped, tag = 'scratch operand']
  #allocation3 [shape = 'f32[8,128]{1,0:T(8,128)}', space=vmem, size = 0x1000, scoped, tag = 'scratch operand']
  #allocation4 [shape = 'f32[8,8,128]{2,1,0:T(8,128)}', space=vmem, size = 0x8000, scoped, tag = 'scratch operand']
  %s0 = inlined_call_operand.hbm [shape: bf16[16,16,128], index: 0, kind: input, shape index: {}]
  %s1 = inlined_call_operand.vmem [shape: bf16[128,128], index: 1, kind: input, shape index: {}]
  %s2 = inlined_call_operand.hbm [shape: bf16[128,128], index: 2, kind: input, shape index: {}]
  %s3 = inlined_call_operand.vmem [shape: f32[1,128], index: 3, kind: input, shape index: {}]
  %s4 = inlined_call_operand.vmem [shape: bf16[128,2], index: 4, kind: input, shape index: {}]
  %s5 = inlined_call_operand.vmem [shape: f32[1,2], index: 5, kind: input, shape index: {}]
  %s6 = inlined_call_operand.vmem [shape: f32[16,2], index: 6, kind: output, shape index: {}]
  %s7 = sld [smem:[#allocation0]]
  $region73: #{tpu_custom_call.1} parent=0
    _
  %s9 = ssub.s32 1, %s7
  %s10 = scalar_select 0, %s9, %s7
  $region1: #{tpu_custom_call.1} parent=0
    #allocation5 [shape = 'u8[32768]{0}', space=vmem, size = 0x8000, scoped, tag = 'input window, operand 0']
    #allocation6 [shape = 's32[2]{0}', space=sflag, size = 0x8, scoped, tag = 'scoped memory for tpu_custom_call.1']
    #allocation7 [shape = 'u8[32768]{0}', space=vmem, size = 0x8000, scoped, tag = 'input window, operand 2, single buffered']
    #allocation8 [shape = 's32[1]{0}', space=sflag, size = 0x4, scoped, tag = 'scoped memory for tpu_custom_call.1']
    %11 = vsyncpa [#allocation6], 0
    %s12 = scalar_lea.sflag [#allocation6], 1
    %13 = vsyncpa %s12, 0
    %14 = vsyncpa [#allocation8], 0
    loop: start=0, step=1, limit=6
    $region2: #{tpu_custom_call.1} parent=1 // loop_pre_header
      _
    $region3: #{tpu_custom_call.1} parent=1 // loop_header
      %s16 = sphi 0, %s20
      %p17 = scmp.ge.s32.totalorder %s16, 6
      %s23 = sphi 0, %s35
      %s24 = sphi 0, %s31
      %s25 = sphi 0, %s23
      %s26 = sphi 0, %s24
      %s27 = sphi 0, %s25
      %s28 = sphi 0, %s26
      %s40 = sphi 0, %s42
      %s43 = sphi 0, %s40
      %s44 = sphi 0, %s43
      %s60 = sphi 0, %s44
      %s64 = sphi 0, %s64
      %s66 = sphi 0, %s64
      %s67 = sphi 0, %s66
      %s81 = sphi 0, %s67
      %s85 = sphi 0, %s85
      %s87 = sphi 0, %s85
      %s88 = sphi 0, %s87
      %s102 = sphi 0, %s88
      %s106 = sphi 0, %s106
      %s108 = sphi 0, %s106
      %s109 = sphi 0, %s108
      %s123 = sphi 0, %s109
      %s127 = sphi 0, %s127
      %s129 = sphi 0, %s127
      %s130 = sphi 0, %s129
      %s144 = sphi 0, %s130
      %s148 = sphi 0, %s148
      %s150 = sphi 0, %s148
      %s151 = sphi 0, %s150
      %s165 = sphi 0, %s151
      %s171 = sphi 0, %s173
      %s174 = sphi 0, %s171
      %s175 = sphi 0, %s174
      %s191 = sphi 0, %s175
    $region4: #{tpu_custom_call.1} parent=1 // loop_header_branch
      %19 = sbr.rel (%p17) target = $region8
    $region5: #{tpu_custom_call.1} parent=1 // loop_body
      %s21 = ssub.s32 %s16, 1
      %s22 = ssub.s32 %s16, 2
      %s29 = sadd.s32 1, %s24
      %p30 = scmp.ge.s32.totalorder %s29, 2
      %s31 = scalar_select %p30, 0, %s29
      %s32 = sadd.s32 1, %s23
      %s33 = scalar_select %p30, %s32, %s23
      %p34 = scmp.ge.s32.totalorder %s33, 2
      %s35 = scalar_select %p34, 0, %s33
      %s36 = ssub.s32 %s24, %s31
      %s37 = ssub.s32 %s23, %s35
      %s38 = sor.u32 %s36, %s37
      %p39 = scmp.eq.s32.totalorder %s38, 0
      %s41 = sadd.s32 %s40, 1
      %s42 = scalar_select %p39, %s40, %s41
      %p45 = pneg %p39
      %p46 = scmp.eq.s32.totalorder %s16, 3
      %p47 = por %p45, %p46
      %p48 = scmp.ne.s32.totalorder %s40, %s43
      %p49 = scmp.eq.s32.totalorder %s16, 0
      %p50 = por %p48, %p49
      %p51 = scmp.ne.s32.totalorder %s40, %s43
      %p52 = scmp.eq.s32.totalorder %s21, 3
      %p53 = por %p51, %p52
      %p54 = scmp.ne.s32.totalorder %s43, %s44
      %p55 = scmp.eq.s32.totalorder %s21, 0
      %p56 = por %p54, %p55
      %p57 = scmp.ne.s32.totalorder %s43, %s44
      %p58 = scmp.eq.s32.totalorder %s22, 3
      %p59 = por %p57, %p58
      %p61 = scmp.ne.s32.totalorder %s44, %s60
      %p62 = scmp.eq.s32.totalorder %s22, 0
      %p63 = por %p61, %p62
      %s65 = sadd.s32 %s64, 1
      %p68 = scmp.eq.s32.totalorder %s16, 3
      %p69 = scmp.ne.s32.totalorder %s64, %s66
      %p70 = scmp.eq.s32.totalorder %s16, 0
      %p71 = por %p69, %p70
      %p72 = scmp.ne.s32.totalorder %s64, %s66
      %p73 = scmp.eq.s32.totalorder %s21, 3
      %p74 = por %p72, %p73
      %p75 = scmp.ne.s32.totalorder %s66, %s67
      %p76 = scmp.eq.s32.totalorder %s21, 0
      %p77 = por %p75, %p76
      %p78 = scmp.ne.s32.totalorder %s66, %s67
      %p79 = scmp.eq.s32.totalorder %s22, 3
      %p80 = por %p78, %p79
      %p82 = scmp.ne.s32.totalorder %s67, %s81
      %p83 = scmp.eq.s32.totalorder %s22, 0
      %p84 = por %p82, %p83
      %s86 = sadd.s32 %s85, 1
      %p89 = scmp.eq.s32.totalorder %s16, 3
      %p90 = scmp.ne.s32.totalorder %s85, %s87
      %p91 = scmp.eq.s32.totalorder %s16, 0
      %p92 = por %p90, %p91
      %p93 = scmp.ne.s32.totalorder %s85, %s87
      %p94 = scmp.eq.s32.totalorder %s21, 3
      %p95 = por %p93, %p94
      %p96 = scmp.ne.s32.totalorder %s87, %s88
      %p97 = scmp.eq.s32.totalorder %s21, 0
      %p98 = por %p96, %p97
      %p99 = scmp.ne.s32.totalorder %s87, %s88
      %p100 = scmp.eq.s32.totalorder %s22, 3
      %p101 = por %p99, %p100
      %p103 = scmp.ne.s32.totalorder %s88, %s102
      %p104 = scmp.eq.s32.totalorder %s22, 0
      %p105 = por %p103, %p104
      %s107 = sadd.s32 %s106, 1
      %p110 = scmp.eq.s32.totalorder %s16, 3
      %p111 = scmp.ne.s32.totalorder %s106, %s108
      %p112 = scmp.eq.s32.totalorder %s16, 0
      %p113 = por %p111, %p112
      %p114 = scmp.ne.s32.totalorder %s106, %s108
      %p115 = scmp.eq.s32.totalorder %s21, 3
      %p116 = por %p114, %p115
      %p117 = scmp.ne.s32.totalorder %s108, %s109
      %p118 = scmp.eq.s32.totalorder %s21, 0
      %p119 = por %p117, %p118
      %p120 = scmp.ne.s32.totalorder %s108, %s109
      %p121 = scmp.eq.s32.totalorder %s22, 3
      %p122 = por %p120, %p121
      %p124 = scmp.ne.s32.totalorder %s109, %s123
      %p125 = scmp.eq.s32.totalorder %s22, 0
      %p126 = por %p124, %p125
      %s128 = sadd.s32 %s127, 1
      %p131 = scmp.eq.s32.totalorder %s16, 3
      %p132 = scmp.ne.s32.totalorder %s127, %s129
      %p133 = scmp.eq.s32.totalorder %s16, 0
      %p134 = por %p132, %p133
      %p135 = scmp.ne.s32.totalorder %s127, %s129
      %p136 = scmp.eq.s32.totalorder %s21, 3
      %p137 = por %p135, %p136
      %p138 = scmp.ne.s32.totalorder %s129, %s130
      %p139 = scmp.eq.s32.totalorder %s21, 0
      %p140 = por %p138, %p139
      %p141 = scmp.ne.s32.totalorder %s129, %s130
      %p142 = scmp.eq.s32.totalorder %s22, 3
      %p143 = por %p141, %p142
      %p145 = scmp.ne.s32.totalorder %s130, %s144
      %p146 = scmp.eq.s32.totalorder %s22, 0
      %p147 = por %p145, %p146
      %s149 = sadd.s32 %s148, 1
      %p152 = scmp.eq.s32.totalorder %s16, 3
      %p153 = scmp.ne.s32.totalorder %s148, %s150
      %p154 = scmp.eq.s32.totalorder %s16, 0
      %p155 = por %p153, %p154
      %p156 = scmp.ne.s32.totalorder %s148, %s150
      %p157 = scmp.eq.s32.totalorder %s21, 3
      %p158 = por %p156, %p157
      %p159 = scmp.ne.s32.totalorder %s150, %s151
      %p160 = scmp.eq.s32.totalorder %s21, 0
      %p161 = por %p159, %p160
      %p162 = scmp.ne.s32.totalorder %s150, %s151
      %p163 = scmp.eq.s32.totalorder %s22, 3
      %p164 = por %p162, %p163
      %p166 = scmp.ne.s32.totalorder %s151, %s165
      %p167 = scmp.eq.s32.totalorder %s22, 0
      %p168 = por %p166, %p167
      %s169 = ssub.s32 %s23, %s35
      %p170 = scmp.eq.s32.totalorder %s169, 0
      %s172 = sadd.s32 %s171, 1
      %s173 = scalar_select %p170, %s171, %s172
      %p176 = pneg %p170
      %p177 = scmp.eq.s32.totalorder %s16, 3
      %p178 = por %p176, %p177
      %p179 = scmp.ne.s32.totalorder %s171, %s174
      %p180 = scmp.eq.s32.totalorder %s16, 0
      %p181 = por %p179, %p180
      %p182 = scmp.ne.s32.totalorder %s171, %s174
      %p183 = scmp.eq.s32.totalorder %s21, 3
      %p184 = por %p182, %p183
      %p185 = scmp.ne.s32.totalorder %s174, %s175
      %p186 = scmp.eq.s32.totalorder %s21, 0
      %p187 = por %p185, %p186
      %p188 = scmp.ne.s32.totalorder %s174, %s175
      %p189 = scmp.eq.s32.totalorder %s22, 3
      %p190 = por %p188, %p189
      %p192 = scmp.ne.s32.totalorder %s175, %s191
      %p193 = scmp.eq.s32.totalorder %s22, 0
      %p194 = por %p192, %p193
      %p195 = scmp.le.s32.totalorder 1, %s16
      %p196 = scmp.lt.s32.totalorder %s16, 5
      %p197 = pnand %p195, %p196
      %p198 = pneg %p197
      // Predicated region
      $region9: #{tpu_custom_call.1} parent=5 // pred_check
        _
      $region10: #{tpu_custom_call.1} parent=5 // pred_check_branch
        %200 = sbr.rel (%p197) target = $region12
      $region11: #{tpu_custom_call.1} parent=5 // pred_region
        %s201 = ssub.s32 %s16, 1
        // Predicated region
        $region13: #{tpu_custom_call.1} parent=11 // pred_check
          %p202 = pneg %p77
        $region14: #{tpu_custom_call.1} parent=11 // pred_check_branch
          %204 = sbr.rel (%p202) target = $region16
        $region15: #{tpu_custom_call.1} parent=11 // pred_region
          _
        $region16: #{tpu_custom_call.1} parent=11 // pred_fallthru
          _
        // Predicated region
        $region17: #{tpu_custom_call.1} parent=11 // pred_check
          %p205 = pneg %p98
        $region18: #{tpu_custom_call.1} parent=11 // pred_check_branch
          %207 = sbr.rel (%p205) target = $region20
        $region19: #{tpu_custom_call.1} parent=11 // pred_region
          %209 = vsyncadd [#allocation8], 0
          %s210 = sshll.u32 %s2, 4
          %s211 = int_to_ptr.hbm [resolvable:$true] %s210
          %s212 = sshll.u32 [#allocation7], 4
          %s213 = int_to_ptr.vmem [resolvable:$true] %s212
          %218 = dma.hbm_to_vmem [thread:$0]  %s211, 1024, %s213, [#allocation8], 64, 64, 4
        $region20: #{tpu_custom_call.1} parent=11 // pred_fallthru
          _
        // Predicated region
        $region21: #{tpu_custom_call.1} parent=11 // pred_check
          %p219 = pneg %p119
        $region22: #{tpu_custom_call.1} parent=11 // pred_check_branch
          %221 = sbr.rel (%p219) target = $region24
        $region23: #{tpu_custom_call.1} parent=11 // pred_region
          _
        $region24: #{tpu_custom_call.1} parent=11 // pred_fallthru
          _
        // Predicated region
        $region25: #{tpu_custom_call.1} parent=11 // pred_check
          %p222 = pneg %p140
        $region26: #{tpu_custom_call.1} parent=11 // pred_check_branch
          %224 = sbr.rel (%p222) target = $region28
        $region27: #{tpu_custom_call.1} parent=11 // pred_region
          _
        $region28: #{tpu_custom_call.1} parent=11 // pred_fallthru
          _
        // Predicated region
        $region29: #{tpu_custom_call.1} parent=11 // pred_check
          %p225 = pneg %p161
        $region30: #{tpu_custom_call.1} parent=11 // pred_check_branch
          %227 = sbr.rel (%p225) target = $region32
        $region31: #{tpu_custom_call.1} parent=11 // pred_region
          _
        $region32: #{tpu_custom_call.1} parent=11 // pred_fallthru
          _
      $region12: #{tpu_custom_call.1} parent=5 // pred_fallthru
        _
      %p228 = scmp.lt.s32.totalorder %s16, 4
      // Predicated region
      $region33: #{tpu_custom_call.1} parent=5 // pred_check
        %p229 = pneg %p228
      $region34: #{tpu_custom_call.1} parent=5 // pred_check_branch
        %231 = sbr.rel (%p229) target = $region36
      $region35: #{tpu_custom_call.1} parent=5 // pred_region
        // Predicated region
        $region37: #{tpu_custom_call.1} parent=35 // pred_check
          %p232 = pneg %p50
        $region38: #{tpu_custom_call.1} parent=35 // pred_check_branch
          %234 = sbr.rel (%p232) target = $region40
        $region39: #{tpu_custom_call.1} parent=35 // pred_region
          %s235 = sand.u32 %s40, 1
          %s236 = scalar_lea.sflag [#allocation6], %s235
          %s237 = sand.u32 %s40, 1
          %s238 = smul.addr %s237, 32
          %s239 = scalar_lea.vmem [#allocation5], %s238
          %s240 = smul.u32 8, %s24
          %242 = vsyncadd %s236, 0
          %s243 = smul.addr %s240, 2
          %s244 = sadd.s32 %s23, %s243
          %s245 = smul.addr %s244, 4
          %s246 = scalar_lea.hbm %s0, %s245
          %s247 = sshll.u32 %s246, 4
          %s248 = int_to_ptr.hbm [resolvable:$true] %s247
          %s249 = sshll.u32 %s239, 4
          %s250 = int_to_ptr.vmem [resolvable:$true] %s249
          %255 = dma.hbm_to_vmem [thread:$0]  %s248, 512, %s250, %s236, 128, 64, 4
        $region40: #{tpu_custom_call.1} parent=35 // pred_fallthru
          _
      $region36: #{tpu_custom_call.1} parent=5 // pred_fallthru
        _
      %p256 = scmp.le.s32.totalorder 1, %s16
      %p257 = scmp.lt.s32.totalorder %s16, 5
      %p258 = pnand %p256, %p257
      %p259 = pneg %p258
      // Predicated region
      $region41: #{tpu_custom_call.1} parent=5 // pred_check
        _
      $region42: #{tpu_custom_call.1} parent=5 // pred_check_branch
        %261 = sbr.rel (%p258) target = $region44
      $region43: #{tpu_custom_call.1} parent=5 // pred_region
        %s262 = ssub.s32 %s16, 1
        %s263 = sand.u32 %s43, 1
        %s264 = scalar_lea.sflag [#allocation6], %s263
        %s265 = sand.u32 %s43, 1
        %s266 = smul.addr %s265, 32
        %s267 = scalar_lea.vmem [#allocation5], %s266
        // Predicated region
        $region45: #{tpu_custom_call.1} parent=43 // pred_check
          %p268 = pneg %p56
        $region46: #{tpu_custom_call.1} parent=43 // pred_check_branch
          %270 = sbr.rel (%p268) target = $region48
        $region47: #{tpu_custom_call.1} parent=43 // pred_region
          %272 = dma.done %s264, 512
        $region48: #{tpu_custom_call.1} parent=43 // pred_fallthru
          _
        // Predicated region
        $region49: #{tpu_custom_call.1} parent=43 // pred_check
          %p273 = pneg %p98
        $region50: #{tpu_custom_call.1} parent=43 // pred_check_branch
          %275 = sbr.rel (%p273) target = $region52
        $region51: #{tpu_custom_call.1} parent=43 // pred_region
          %277 = dma.done [#allocation8], 1024
        $region52: #{tpu_custom_call.1} parent=43 // pred_fallthru
          _
        %s278 = sand.u32 %s43, 1
        %s279 = scalar_lea.sflag [#allocation6], %s278
        %s280 = sand.u32 %s43, 1
        %s281 = smul.addr %s280, 32
        %s282 = scalar_lea.vmem [#allocation5], %s281
        %p283 = pneg %p56
        %p284 = pneg %p53
        %p285 = pneg %p77
        %p286 = pneg %p74
        %p287 = pneg %p98
        %p288 = pneg %p95
        %p289 = pneg %p119
        %p290 = pneg %p116
        %p291 = pneg %p140
        %p292 = pneg %p137
        %p293 = pneg %p161
        %p294 = pneg %p158
        %p295 = pneg %p187
        %p296 = pneg %p184
        %p297 = scmp.lt.s32.totalorder %s25, 1
        %s298 = scalar_select %p297, %s25, 1
        %s299 = smul.addr %s298, 8
        %s300 = scalar_lea.vmem %s6, %s299
        %s301 = smul.u32 8, %s26
        %p302 = scmp.lt.s32.totalorder %s25, 1
        %s303 = scalar_select %p302, %s25, 1
        %s304 = smul.addr %s303, 8
        %s305 = scalar_lea.vmem %s6, %s304
        %p306 = scmp.eq.s32.totalorder %s26, 0
        // Predicated region
        $region53: #{tpu_custom_call.1} parent=43 // pred_check
          %p307 = pneg %p306
        $region54: #{tpu_custom_call.1} parent=43 // pred_check_branch
          %309 = sbr.rel (%p307) target = $region56
        $region55: #{tpu_custom_call.1} parent=43 // pred_region
          %310 = vst [vmem:[#allocation2] sm:$0xff] 0.0
          %311 = vst [vmem:[#allocation3] sm:$0xff] -1.0
        $region56: #{tpu_custom_call.1} parent=43 // pred_fallthru
          _
        %v312 = vld [vmem:[%s267] sm:$0xf]
        %v313 = vld [vmem:[%s267 + $0x4] sm:$0xf]
        %v314 = vld [vmem:[%s267 + $0x8] sm:$0xf]
        %v315 = vld [vmem:[%s267 + $0xc] sm:$0xf]
        %v316 = vld [vmem:[%s267 + $0x10] sm:$0xf]
        %v317 = vld [vmem:[%s267 + $0x14] sm:$0xf]
        %v318 = vld [vmem:[%s267 + $0x18] sm:$0xf]
        %v319 = vld [vmem:[%s267 + $0x1c] sm:$0xf]
        %v320 = vld [vmem:[%s1] sm:$0xf]
        %v321 = vld [vmem:[%s1 + $0x4] sm:$0xf]
        %v322 = vld [vmem:[%s1 + $0x8] sm:$0xf]
        %v323 = vld [vmem:[%s1 + $0xc] sm:$0xf]
        %v324 = vld [vmem:[%s1 + $0x10] sm:$0xf]
        %v325 = vld [vmem:[%s1 + $0x14] sm:$0xf]
        %v326 = vld [vmem:[%s1 + $0x18] sm:$0xf]
        %v327 = vld [vmem:[%s1 + $0x1c] sm:$0xf]
        %v328 = vld [vmem:[%s1 + $0x20] sm:$0xf]
        %v329 = vld [vmem:[%s1 + $0x24] sm:$0xf]
        %v330 = vld [vmem:[%s1 + $0x28] sm:$0xf]
        %v331 = vld [vmem:[%s1 + $0x2c] sm:$0xf]
        %v332 = vld [vmem:[%s1 + $0x30] sm:$0xf]
        %v333 = vld [vmem:[%s1 + $0x34] sm:$0xf]
        %v334 = vld [vmem:[%s1 + $0x38] sm:$0xf]
        %v335 = vld [vmem:[%s1 + $0x3c] sm:$0xf]
        %v336 = vld [vmem:[%s3] sm:$0x1]
        %v338 = vperm.slane %v336, 0
        %v348 = vunpack.c.l.b16 %v312
        %v349 = vunpack.c.l.b16 %v313
        %v350 = vunpack.c.l.b16 %v314
        %v351 = vunpack.c.l.b16 %v315
        %v352 = vunpack.c.l.b16 %v316
        %v353 = vunpack.c.l.b16 %v317
        %v354 = vunpack.c.l.b16 %v318
        %v355 = vunpack.c.l.b16 %v319
        %v356 = vpack.c.b16 %v349, %v348
        %v357 = vpack.c.b16 %v351, %v350
        %v358 = vpack.c.b16 %v353, %v352
        %v359 = vpack.c.b16 %v355, %v354
        %v380 = vunpack.c.l.b16 %v320
        %v381 = vunpack.c.l.b16 %v321
        %v382 = vunpack.c.l.b16 %v322
        %v383 = vunpack.c.l.b16 %v323
        %v384 = vunpack.c.l.b16 %v324
        %v385 = vunpack.c.l.b16 %v325
        %v386 = vunpack.c.l.b16 %v326
        %v387 = vunpack.c.l.b16 %v327
        %v388 = vunpack.c.l.b16 %v328
        %v389 = vunpack.c.l.b16 %v329
        %v390 = vunpack.c.l.b16 %v330
        %v391 = vunpack.c.l.b16 %v331
        %v392 = vunpack.c.l.b16 %v332
        %v393 = vunpack.c.l.b16 %v333
        %v394 = vunpack.c.l.b16 %v334
        %v395 = vunpack.c.l.b16 %v335
        %v396 = vpack.c.b16 %v381, %v380
        %v397 = vpack.c.b16 %v383, %v382
        %v398 = vpack.c.b16 %v385, %v384
        %v399 = vpack.c.b16 %v387, %v386
        %v400 = vpack.c.b16 %v389, %v388
        %v401 = vpack.c.b16 %v391, %v390
        %v402 = vpack.c.b16 %v393, %v392
        %v403 = vpack.c.b16 %v395, %v394
        %412 = vmatpush.bf16.msra.mxu0 %v403
        %413 = vmatpush.bf16.msra.mxu0 %v402
        %414 = vmatpush.bf16.msra.mxu0 %v401
        %415 = vmatpush.bf16.msra.mxu0 %v400
        %416 = vmatpush.bf16.msra.mxu0 %v399
        %417 = vmatpush.bf16.msra.mxu0 %v398
        %418 = vmatpush.bf16.msra.mxu0 %v397
        %419 = vmatpush.bf16.msra.mxu0 %v396
        %420 = vmatmul.bf16.gmra.mxu0 %v356
        %v421 = vpop.f32.mrf.mxu0
        %v422 = vadd.f32 %v338, %v421
        %v423 = vpop.f32.mrf.mxu0
        %v424 = vadd.f32 %v338, %v423
        %425 = vmatmul.bf16.gmra.mxu0 %v357
        %v426 = vpop.f32.mrf.mxu0
        %v427 = vadd.f32 %v338, %v426
        %v428 = vpop.f32.mrf.mxu0
        %v429 = vadd.f32 %v338, %v428
        %430 = vmatmul.bf16.gmra.mxu0 %v358
        %v431 = vpop.f32.mrf.mxu0
        %v432 = vadd.f32 %v338, %v431
        %v433 = vpop.f32.mrf.mxu0
        %v434 = vadd.f32 %v338, %v433
        %435 = vmatmul.bf16.gmra.mxu0 %v359
        %v436 = vpop.f32.mrf.mxu0
        %v437 = vadd.f32 %v338, %v436
        %v438 = vpop.f32.mrf.mxu0
        %v439 = vadd.f32 %v338, %v438
        %440 = vdwg.mxu0
        %441 = vst [vmem:[#allocation4] sm:$0xff] %v422
        %442 = vst [vmem:[#allocation4 + $0x8] sm:$0xff] %v424
        %443 = vst [vmem:[#allocation4 + $0x10] sm:$0xff] %v427
        %444 = vst [vmem:[#allocation4 + $0x18] sm:$0xff] %v429
        %445 = vst [vmem:[#allocation4 + $0x20] sm:$0xff] %v432
        %446 = vst [vmem:[#allocation4 + $0x28] sm:$0xff] %v434
        %447 = vst [vmem:[#allocation4 + $0x30] sm:$0xff] %v437
        %448 = vst [vmem:[#allocation4 + $0x38] sm:$0xff] %v439
        %v449 = vld [vmem:[#allocation7] sm:$0xf]
        %v450 = vld [vmem:[#allocation7 + $0x4] sm:$0xf]
        %v451 = vld [vmem:[#allocation7 + $0x8] sm:$0xf]
        %v452 = vld [vmem:[#allocation7 + $0xc] sm:$0xf]
        %v453 = vld [vmem:[#allocation7 + $0x10] sm:$0xf]
        %v454 = vld [vmem:[#allocation7 + $0x14] sm:$0xf]
        %v455 = vld [vmem:[#allocation7 + $0x18] sm:$0xf]
        %v456 = vld [vmem:[#allocation7 + $0x1c] sm:$0xf]
        %v457 = vld [vmem:[#allocation7 + $0x20] sm:$0xf]
        %v458 = vld [vmem:[#allocation7 + $0x24] sm:$0xf]
        %v459 = vld [vmem:[#allocation7 + $0x28] sm:$0xf]
        %v460 = vld [vmem:[#allocation7 + $0x2c] sm:$0xf]
        %v461 = vld [vmem:[#allocation7 + $0x30] sm:$0xf]
        %v462 = vld [vmem:[#allocation7 + $0x34] sm:$0xf]
        %v463 = vld [vmem:[#allocation7 + $0x38] sm:$0xf]
        %v464 = vld [vmem:[#allocation7 + $0x3c] sm:$0xf]
        %v465 = vld [vmem:[#allocation2] sm:$0xff]
        %v466 = vld [vmem:[#allocation3] sm:$0xff]
        %v467 = vld [vmem:[#allocation4] sm:$0xff]
        %v468 = vpack.c.bf16 %v465, %v465
        %v485 = vunpack.c.l.b16 %v449
        %v486 = vunpack.c.l.b16 %v450
        %v487 = vunpack.c.l.b16 %v451
        %v488 = vunpack.c.l.b16 %v452
        %v489 = vunpack.c.l.b16 %v453
        %v490 = vunpack.c.l.b16 %v454
        %v491 = vunpack.c.l.b16 %v455
        %v492 = vunpack.c.l.b16 %v456
        %v493 = vunpack.c.l.b16 %v457
        %v494 = vunpack.c.l.b16 %v458
        %v495 = vunpack.c.l.b16 %v459
        %v496 = vunpack.c.l.b16 %v460
        %v497 = vunpack.c.l.b16 %v461
        %v498 = vunpack.c.l.b16 %v462
        %v499 = vunpack.c.l.b16 %v463
        %v500 = vunpack.c.l.b16 %v464
        %v501 = vpack.c.b16 %v486, %v485
        %v502 = vpack.c.b16 %v488, %v487
        %v503 = vpack.c.b16 %v490, %v489
        %v504 = vpack.c.b16 %v492, %v491
        %v505 = vpack.c.b16 %v494, %v493
        %v506 = vpack.c.b16 %v496, %v495
        %v507 = vpack.c.b16 %v498, %v497
        %v508 = vpack.c.b16 %v500, %v499
        %517 = vmatpush.bf16.msra.mxu0 %v508
        %518 = vmatpush.bf16.msra.mxu0 %v507
        %519 = vmatpush.bf16.msra.mxu0 %v506
        %520 = vmatpush.bf16.msra.mxu0 %v505
        %521 = vmatpush.bf16.msra.mxu0 %v504
        %522 = vmatpush.bf16.msra.mxu0 %v503
        %523 = vmatpush.bf16.msra.mxu0 %v502
        %524 = vmatpush.bf16.msra.mxu0 %v501
        %525 = vmatmul.bf16.gmra.mxu0 %v468
        %v526 = vpop.f32.mrf.mxu0
        %v527 = vadd.f32 0.0, %v526
        %v528 = vpop.f32.mrf.mxu0
        %529 = vdwg.mxu0
        %v530 = vadd.f32 %v467, %v527
        %v531 = vtanh.pop %v530
        %v532 = vmax.f32 %v466, %v531
        %s533 = scalar_lea.vmem [#allocation4], 8
        %v534 = vld [vmem:[%s533] sm:$0xff]
        %v535 = vpack.c.bf16 %v531, %v531
        %536 = vmatpush.bf16.msra.mxu0 %v508
        %537 = vmatpush.bf16.msra.mxu0 %v507
        %538 = vmatpush.bf16.msra.mxu0 %v506
        %539 = vmatpush.bf16.msra.mxu0 %v505
        %540 = vmatpush.bf16.msra.mxu0 %v504
        %541 = vmatpush.bf16.msra.mxu0 %v503
        %542 = vmatpush.bf16.msra.mxu0 %v502
        %543 = vmatpush.bf16.msra.mxu0 %v501
        %544 = vmatmul.bf16.gmra.mxu0 %v535
        %v545 = vpop.f32.mrf.mxu0
        %v546 = vadd.f32 0.0, %v545
        %v547 = vpop.f32.mrf.mxu0
        %548 = vdwg.mxu0
        %v549 = vadd.f32 %v534, %v546
        %v550 = vtanh.pop %v549
        %v551 = vmax.f32 %v532, %v550
        %s552 = scalar_lea.vmem [#allocation4], 16
        %v553 = vld [vmem:[%s552] sm:$0xff]
        %v554 = vpack.c.bf16 %v550, %v550
        %555 = vmatpush.bf16.msra.mxu0 %v508
        %556 = vmatpush.bf16.msra.mxu0 %v507
        %557 = vmatpush.bf16.msra.mxu0 %v506
        %558 = vmatpush.bf16.msra.mxu0 %v505
        %559 = vmatpush.bf16.msra.mxu0 %v504
        %560 = vmatpush.bf16.msra.mxu0 %v503
        %561 = vmatpush.bf16.msra.mxu0 %v502
        %562 = vmatpush.bf16.msra.mxu0 %v501
        %563 = vmatmul.bf16.gmra.mxu0 %v554
        %v564 = vpop.f32.mrf.mxu0
        %v565 = vadd.f32 0.0, %v564
        %v566 = vpop.f32.mrf.mxu0
        %567 = vdwg.mxu0
        %v568 = vadd.f32 %v553, %v565
        %v569 = vtanh.pop %v568
        %v570 = vmax.f32 %v551, %v569
        %s571 = scalar_lea.vmem [#allocation4], 24
        %v572 = vld [vmem:[%s571] sm:$0xff]
        %v573 = vpack.c.bf16 %v569, %v569
        %574 = vmatpush.bf16.msra.mxu0 %v508
        %575 = vmatpush.bf16.msra.mxu0 %v507
        %576 = vmatpush.bf16.msra.mxu0 %v506
        %577 = vmatpush.bf16.msra.mxu0 %v505
        %578 = vmatpush.bf16.msra.mxu0 %v504
        %579 = vmatpush.bf16.msra.mxu0 %v503
        %580 = vmatpush.bf16.msra.mxu0 %v502
        %581 = vmatpush.bf16.msra.mxu0 %v501
        %582 = vmatmul.bf16.gmra.mxu0 %v573
        %v583 = vpop.f32.mrf.mxu0
        %v584 = vadd.f32 0.0, %v583
        %v585 = vpop.f32.mrf.mxu0
        %586 = vdwg.mxu0
        %v587 = vadd.f32 %v572, %v584
        %v588 = vtanh.pop %v587
        %v589 = vmax.f32 %v570, %v588
        %s590 = scalar_lea.vmem [#allocation4], 32
        %v591 = vld [vmem:[%s590] sm:$0xff]
        %v592 = vpack.c.bf16 %v588, %v588
        %593 = vmatpush.bf16.msra.mxu0 %v508
        %594 = vmatpush.bf16.msra.mxu0 %v507
        %595 = vmatpush.bf16.msra.mxu0 %v506
        %596 = vmatpush.bf16.msra.mxu0 %v505
        %597 = vmatpush.bf16.msra.mxu0 %v504
        %598 = vmatpush.bf16.msra.mxu0 %v503
        %599 = vmatpush.bf16.msra.mxu0 %v502
        %600 = vmatpush.bf16.msra.mxu0 %v501
        %601 = vmatmul.bf16.gmra.mxu0 %v592
        %v602 = vpop.f32.mrf.mxu0
        %v603 = vadd.f32 0.0, %v602
        %v604 = vpop.f32.mrf.mxu0
        %605 = vdwg.mxu0
        %v606 = vadd.f32 %v591, %v603
        %v607 = vtanh.pop %v606
        %v608 = vmax.f32 %v589, %v607
        %s609 = scalar_lea.vmem [#allocation4], 40
        %v610 = vld [vmem:[%s609] sm:$0xff]
        %v611 = vpack.c.bf16 %v607, %v607
        %612 = vmatpush.bf16.msra.mxu0 %v508
        %613 = vmatpush.bf16.msra.mxu0 %v507
        %614 = vmatpush.bf16.msra.mxu0 %v506
        %615 = vmatpush.bf16.msra.mxu0 %v505
        %616 = vmatpush.bf16.msra.mxu0 %v504
        %617 = vmatpush.bf16.msra.mxu0 %v503
        %618 = vmatpush.bf16.msra.mxu0 %v502
        %619 = vmatpush.bf16.msra.mxu0 %v501
        %620 = vmatmul.bf16.gmra.mxu0 %v611
        %v621 = vpop.f32.mrf.mxu0
        %v622 = vadd.f32 0.0, %v621
        %v623 = vpop.f32.mrf.mxu0
        %624 = vdwg.mxu0
        %v625 = vadd.f32 %v610, %v622
        %v626 = vtanh.pop %v625
        %v627 = vmax.f32 %v608, %v626
        %s628 = scalar_lea.vmem [#allocation4], 48
        %v629 = vld [vmem:[%s628] sm:$0xff]
        %v630 = vpack.c.bf16 %v626, %v626
        %631 = vmatpush.bf16.msra.mxu0 %v508
        %632 = vmatpush.bf16.msra.mxu0 %v507
        %633 = vmatpush.bf16.msra.mxu0 %v506
        %634 = vmatpush.bf16.msra.mxu0 %v505
        %635 = vmatpush.bf16.msra.mxu0 %v504
        %636 = vmatpush.bf16.msra.mxu0 %v503
        %637 = vmatpush.bf16.msra.mxu0 %v502
        %638 = vmatpush.bf16.msra.mxu0 %v501
        %639 = vmatmul.bf16.gmra.mxu0 %v630
        %v640 = vpop.f32.mrf.mxu0
        %v641 = vadd.f32 0.0, %v640
        %v642 = vpop.f32.mrf.mxu0
        %643 = vdwg.mxu0
        %v644 = vadd.f32 %v629, %v641
        %v645 = vtanh.pop %v644
        %v646 = vmax.f32 %v627, %v645
        %s647 = scalar_lea.vmem [#allocation4], 56
        %v648 = vld [vmem:[%s647] sm:$0xff]
        %v649 = vpack.c.bf16 %v645, %v645
        %650 = vmatpush.bf16.msra.mxu0 %v508
        %651 = vmatpush.bf16.msra.mxu0 %v507
        %652 = vmatpush.bf16.msra.mxu0 %v506
        %653 = vmatpush.bf16.msra.mxu0 %v505
        %654 = vmatpush.bf16.msra.mxu0 %v504
        %655 = vmatpush.bf16.msra.mxu0 %v503
        %656 = vmatpush.bf16.msra.mxu0 %v502
        %657 = vmatpush.bf16.msra.mxu0 %v501
        %658 = vmatmul.bf16.gmra.mxu0 %v649
        %v659 = vpop.f32.mrf.mxu0
        %v660 = vadd.f32 0.0, %v659
        %v661 = vpop.f32.mrf.mxu0
        %662 = vdwg.mxu0
        %v663 = vadd.f32 %v648, %v660
        %v664 = vtanh.pop %v663
        %v665 = vmax.f32 %v646, %v664
        %666 = vst [vmem:[#allocation2] sm:$0xff] %v664
        %667 = vst [vmem:[#allocation3] sm:$0xff] %v665
        %p668 = scmp.eq.s32.totalorder %s26, 1
        // Predicated region
        $region57: #{tpu_custom_call.1} parent=43 // pred_check
          %p669 = pneg %p668
        $region58: #{tpu_custom_call.1} parent=43 // pred_check_branch
          %671 = sbr.rel (%p669) target = $region60
        $region59: #{tpu_custom_call.1} parent=43 // pred_region
          %v672 = vpack.c.bf16 %v665, %v665
          %v673 = vld [vmem:[%s4] sm:$0xf]
          %v674 = vld [vmem:[%s4 + $0x4] sm:$0xf]
          %v675 = vld [vmem:[%s4 + $0x8] sm:$0xf]
          %v676 = vld [vmem:[%s4 + $0xc] sm:$0xf]
          %v677 = vld [vmem:[%s4 + $0x10] sm:$0xf]
          %v678 = vld [vmem:[%s4 + $0x14] sm:$0xf]
          %v679 = vld [vmem:[%s4 + $0x18] sm:$0xf]
          %v680 = vld [vmem:[%s4 + $0x1c] sm:$0xf]
          %v681 = vld [vmem:[%s4 + $0x20] sm:$0xf]
          %v682 = vld [vmem:[%s4 + $0x24] sm:$0xf]
          %v683 = vld [vmem:[%s4 + $0x28] sm:$0xf]
          %v684 = vld [vmem:[%s4 + $0x2c] sm:$0xf]
          %v685 = vld [vmem:[%s4 + $0x30] sm:$0xf]
          %v686 = vld [vmem:[%s4 + $0x34] sm:$0xf]
          %v687 = vld [vmem:[%s4 + $0x38] sm:$0xf]
          %v688 = vld [vmem:[%s4 + $0x3c] sm:$0xf]
          %v689 = vld [vmem:[%s5] sm:$0x1]
          %v691 = vperm.slane %v689, 0
          %v709 = vunpack.c.l.b16 %v673
          %v710 = vunpack.c.l.b16 %v674
          %v711 = vunpack.c.l.b16 %v675
          %v712 = vunpack.c.l.b16 %v676
          %v713 = vunpack.c.l.b16 %v677
          %v714 = vunpack.c.l.b16 %v678
          %v715 = vunpack.c.l.b16 %v679
          %v716 = vunpack.c.l.b16 %v680
          %v717 = vunpack.c.l.b16 %v681
          %v718 = vunpack.c.l.b16 %v682
          %v719 = vunpack.c.l.b16 %v683
          %v720 = vunpack.c.l.b16 %v684
          %v721 = vunpack.c.l.b16 %v685
          %v722 = vunpack.c.l.b16 %v686
          %v723 = vunpack.c.l.b16 %v687
          %v724 = vunpack.c.l.b16 %v688
          %v725 = vpack.c.b16 %v710, %v709
          %v726 = vpack.c.b16 %v712, %v711
          %v727 = vpack.c.b16 %v714, %v713
          %v728 = vpack.c.b16 %v716, %v715
          %v729 = vpack.c.b16 %v718, %v717
          %v730 = vpack.c.b16 %v720, %v719
          %v731 = vpack.c.b16 %v722, %v721
          %v732 = vpack.c.b16 %v724, %v723
          %741 = vmatpush.bf16.msra.mxu0 %v732
          %742 = vmatpush.bf16.msra.mxu0 %v731
          %743 = vmatpush.bf16.msra.mxu0 %v730
          %744 = vmatpush.bf16.msra.mxu0 %v729
          %745 = vmatpush.bf16.msra.mxu0 %v728
          %746 = vmatpush.bf16.msra.mxu0 %v727
          %747 = vmatpush.bf16.msra.mxu0 %v726
          %748 = vmatpush.bf16.msra.mxu0 %v725
          %749 = vmatmul.bf16.gmra.mxu0 %v672
          %v750 = vpop.f32.mrf.mxu0
          %v751 = vadd.f32 %v691, %v750
          %v752 = vpop.f32.mrf.mxu0
          %753 = vdwg.mxu0
          %vm754 = vcmask 15360
          %755 = vst.msk [vmem:[%s305] sm:$0xff] %vm754, %v751
        $region60: #{tpu_custom_call.1} parent=43 // pred_fallthru
          _
        %p756 = scmp.lt.s32.totalorder %s25, 1
        %s757 = scalar_select %p756, %s25, 1
        %s758 = smul.addr %s757, 8
        %s759 = scalar_lea.vmem %s6, %s758
        // Predicated region
        $region61: #{tpu_custom_call.1} parent=43 // pred_check
          %p760 = pneg %p184
        $region62: #{tpu_custom_call.1} parent=43 // pred_check_branch
          %762 = sbr.rel (%p760) target = $region64
        $region63: #{tpu_custom_call.1} parent=43 // pred_region
          _
        $region64: #{tpu_custom_call.1} parent=43 // pred_fallthru
          _
      $region44: #{tpu_custom_call.1} parent=5 // pred_fallthru
        _
      %p763 = scmp.le.s32.totalorder 2, %s16
      // Predicated region
      $region65: #{tpu_custom_call.1} parent=5 // pred_check
        %p764 = pneg %p763
      $region66: #{tpu_custom_call.1} parent=5 // pred_check_branch
        %766 = sbr.rel (%p764) target = $region68
      $region67: #{tpu_custom_call.1} parent=5 // pred_region
        %s767 = ssub.s32 %s16, 2
        // Predicated region
        $region69: #{tpu_custom_call.1} parent=67 // pred_check
          %p768 = pneg %p190
        $region70: #{tpu_custom_call.1} parent=67 // pred_check_branch
          %770 = sbr.rel (%p768) target = $region72
        $region71: #{tpu_custom_call.1} parent=67 // pred_region
          %p771 = scmp.lt.s32.totalorder %s27, 1
          %s772 = scalar_select %p771, %s27, 1
          %s773 = smul.addr %s772, 8
          %s774 = scalar_lea.vmem %s6, %s773
        $region72: #{tpu_custom_call.1} parent=67 // pred_fallthru
          _
      $region68: #{tpu_custom_call.1} parent=5 // pred_fallthru
        _
    $region6: #{tpu_custom_call.1} parent=1 // loop_footer
      %s20 = sadd.s32 1, %s16
    $region7: #{tpu_custom_call.1} parent=1 // loop_footer_branch
      %15 = sbr.rel target = $region3
    $region8: #{tpu_custom_call.1} parent=1 // loop_exit
      _
    %775 = vsyncpa [#allocation6], 1
    %s776 = scalar_lea.sflag [#allocation6], 1
    %777 = vsyncpa %s776, 1
    %778 = vsyncpa [#allocation8], 1

</llo_original>
